<compile_context>
chip_gen: v5e
topology: v5e:2x2
jax: 0.10.0
libtpu: 0.0.40
codegen_flags: <defaults>
</compile_context>

<pallas_src>
import functools

import jax
import jax.numpy as jnp
from jax.experimental import pallas as pl
from jax.experimental.pallas import tpu as pltpu


def _round_up(x, m):
    return (x + m - 1) // m * m


def _cdiv(a, b):
    return (a + b - 1) // b


# ----------------------------- kernel 1a: MrSw scores ------------------------------------
def _mrsw_score_kernel(im_ref, s_ref, ind_ref, out_ref, *, tm, r_pad, r, mask_rows):
    """One grid step: partial MrSw scores of `tm` images vs one word-column tile.

    im_ref : (tm*r_pad, D_pad)  compute dtype; mask-folded, flattened image regions.
    s_ref  : (D_pad, tc)        compute dtype; mask-folded sentence words (transposed),
                                one tile of the flattened (sentence, word) axis.
    ind_ref: (tc, B_out)        f32 {0,1} word->sentence fold indicator for this tile.
    out_ref: (tm, B_out)        f32 accumulator, resident across the c grid axis.
    """
    @pl.when(pl.program_id(1) == 0)
    def _():
        out_ref[...] = jnp.zeros_like(out_ref)

    # Word/region alignments for the whole image tile on the MXU: (tm*r_pad, tc).
    a = jnp.dot(im_ref[...], s_ref[...], preferred_element_type=jnp.float32)
    tc = a.shape[-1]
    a = a.reshape(tm, r_pad, tc)
    if mask_rows:
        # Fallback (D % 128 == 0, no spare bias feature): padded region rows must not
        # win the max; real-but-length-masked regions stay at 0 (masked_fill(0)).
        ridx = jax.lax.broadcasted_iota(jnp.int32, (tm, r_pad, tc), 1)
        a = jnp.where(ridx >= r, -1e30, a)
    red = jnp.max(a, axis=1)                                        # (tm, tc)
    # Fold words of each sentence into one column and accumulate across c tiles.
    out_ref[...] += jnp.dot(red, ind_ref[...], preferred_element_type=jnp.float32)


# ----------------------------- kernel 1b: sum / mean scores ------------------------------
def _summean_score_kernel(imsum_ref, ssum_ref, out_ref, *, scale):
    out_ref[...] = scale * jnp.dot(imsum_ref[...], ssum_ref[...],
                                   preferred_element_type=jnp.float32)


# ----------------------------- kernel 2: contrastive loss --------------------------------
def _loss_kernel(scores_ref, out_ref, *, margin, max_violation, n):
    """Contrastive.compute_contrastive_loss on a padded score matrix -> (1, 1) loss.

    Rows/cols >= n (padding) are masked in-kernel; since hinge costs are >= 0 and
    padded entries are forced to 0, the max/sum reductions are exact.
    """
    s = scores_ref[...]
    row_i = jax.lax.broadcasted_iota(jnp.int32, s.shape, 0)
    col_i = jax.lax.broadcasted_iota(jnp.int32, s.shape, 1)
    eye = row_i == col_i
    valid = (row_i < n) & (col_i < n)
    diag = jnp.where(eye & valid, s, 0.0)
    diag_col = jnp.sum(diag, axis=1, keepdims=True)    # d1[i, j] = diag[i]
    diag_row = jnp.sum(diag, axis=0, keepdims=True)    # d2[i, j] = diag[j]
    cost_s = jnp.maximum(margin + s - diag_col, 0.0)
    cost_im = jnp.maximum(margin + s - diag_row, 0.0)
    keep = valid & jnp.logical_not(eye)
    cost_s = jnp.where(keep, cost_s, 0.0)
    cost_im = jnp.where(keep, cost_im, 0.0)
    if max_violation:
        total = (jnp.sum(jnp.max(cost_s, axis=1, keepdims=True), axis=0, keepdims=True) +
                 jnp.sum(jnp.max(cost_im, axis=0, keepdims=True), axis=1, keepdims=True))
    else:
        total = jnp.sum(cost_s, keepdims=True) + jnp.sum(cost_im, keepdims=True)
    out_ref[...] = total


# ------------------------------------ wrapper ---------------------------------------------
def alignment_contrastive_loss(im_set, s_seq, im_len, s_len, *, margin=0.0,
                               max_violation=False, aggregation="MrSw",
                               return_loss=True, return_similarity_mat=False,
                               compute_dtype=jnp.bfloat16):
    # TODO(synk): the module's default aggregation 'sum-max-sentences' is not handled by the
    # original PyTorch forward either (undefined variable); this port implements 'MrSw',
    # 'sum', 'mean'.  'symm'/'MwSr'/'MrAVGw'/'scan-sentences' are not implemented.
    assert aggregation in ("MrSw", "sum", "mean")

    # --- glue (plain JAX): normalization, slicing, mask folding -------------------------
    im = im_set / jnp.maximum(jnp.linalg.norm(im_set, axis=2, keepdims=True), 1e-12)
    s = s_seq / jnp.maximum(jnp.linalg.norm(s_seq, axis=2, keepdims=True), 1e-12)
    im = im[:, 1:, :]
    s = s[:, 1:-2, :]
    # TODO(synk): im_len / s_len must be concrete host ints (cannot be jitted as tracers).
    im_len = [int(l) - 1 for l in im_len]
    s_len = [int(l) - 3 for l in s_len]
    B_i, R, D = im.shape
    B_s, W, _ = s.shape
    if return_loss:
        assert B_i == B_s, "contrastive loss needs a square similarity matrix"

    # Fold the length masks into the operands: zeroed rows/columns feeding the dot give
    # exactly masked_fill(0), so the kernels need no mask inputs and no VPU multiplies.
    imv = (jnp.arange(R)[None, :] < jnp.asarray(im_len, jnp.int32)[:, None]).astype(im.dtype)
    sv = (jnp.arange(W)[None, :] < jnp.asarray(s_len, jnp.int32)[:, None]).astype(s.dtype)
    im_m = im * imv[:, :, None]
    s_m = s * sv[:, :, None]

    B_out = _round_up(B_s, 128)

    if aggregation in ("sum", "mean"):
        # --- kernel 1b: algebraic factorization, one tiny f32 matmul --------------------
        im_sum = jnp.sum(im_m.astype(jnp.float32), axis=1)          # (B_i, D)
        s_sum = jnp.sum(s_m.astype(jnp.float32), axis=1)            # (B_s, D)
        D_pad = _round_up(D, 128)
        Bp = _round_up(B_i, 8)
        im_sum_p = jnp.zeros((Bp, D_pad), jnp.float32).at[:B_i, :D].set(im_sum)
        s_sum_pt = jnp.zeros((D_pad, B_out), jnp.float32).at[:D, :B_s].set(s_sum.T)
        scale = 1.0 if aggregation == "sum" else 1.0 / float(R * W)
        scores_p = pl.pallas_call(
            functools.partial(_summean_score_kernel, scale=scale),
            out_shape=jax.ShapeDtypeStruct((Bp, B_out), jnp.float32),
        )(im_sum_p, s_sum_pt)
    else:
        # --- kernel 1a: MrSw aggregated similarity matrix -------------------------------
        R_pad = _round_up(R, 8)
        D_pad = _round_up(D, 128)
        need_row_mask = R_pad != R
        # Use a spare (padded) feature slot to push padded region rows to -1e30 via the
        # MXU itself; fall back to an in-kernel iota compare when D is lane-exact.
        use_bias_feature = need_row_mask and (D % 128 != 0)
        mask_rows = need_row_mask and not use_bias_feature

        # Image tile: target M = tm*R_pad ~ 512 for the 256-wide MXUs on v6e/v7x.
        tm = max(8, _round_up(_cdiv(512, R_pad), 8))
        tm = min(tm, _round_up(B_i, 8))
        B_i_pad = _round_up(B_i, tm)

        # Word-column tiling (bounds VMEM; "arbitrary" reduction axis, innermost).
        C = B_s * W
        C128 = _round_up(C, 128)
        n_c = _cdiv(C128, 2048)
        tc = _round_up(_cdiv(C128, n_c), 128)
        C_pad = n_c * tc

        # Cast to compute dtype BEFORE pad/reshape/transpose (halves their HBM traffic).
        im_c = im_m.astype(compute_dtype)
        s_c = s_m.astype(compute_dtype)

        im_p = jnp.zeros((B_i_pad, R_pad, D_pad), compute_dtype).at[:B_i, :R, :D].set(im_c)
        s_p = jnp.zeros((C_pad, D_pad), compute_dtype).at[:C, :D].set(s_c.reshape(C, D))
        if use_bias_feature:
            d_bias = D                                   # first padded feature column
            im_p = im_p.at[:, R:, d_bias].set(1.0)       # padded region rows
            s_p = s_p.at[:C, d_bias].set(-1e30)          # every valid word column
        im_flat = im_p.reshape(B_i_pad * R_pad, D_pad)
        sflat_t = jnp.transpose(s_p)                     # (D_pad, C_pad)

        # Precomputed {0,1} word->sentence fold indicator (f32 keeps the fold accurate).
        flat_idx = jnp.arange(C_pad, dtype=jnp.int32)
        col_idx = jnp.arange(B_out, dtype=jnp.int32)
        ind = ((flat_idx[:, None] < C) &
               ((flat_idx[:, None] // W) == col_idx[None, :])).astype(jnp.float32)

        n_i = B_i_pad // tm
        itemsize = jnp.dtype(compute_dtype).itemsize
        vmem_est = (2 * tm * R_pad * D_pad * itemsize     # image tile, double-buffered
                    + 2 * D_pad * tc * itemsize           # sentence word tile
                    + 2 * tc * B_out * 4                  # fold indicator tile
                    + 2 * tm * B_out * 4                  # output tile
                    + tm * R_pad * tc * 4                 # alignment intermediate (f32)
                    + tm * tc * 4)                        # per-column max
        cp_kwargs = dict(dimension_semantics=("parallel", "arbitrary"))
        if vmem_est > 12 * 1024 * 1024:   # below v5e's 16 MiB default -> no dead zone
            try:
                vmem_cap = int(pltpu.get_tpu_info().vmem_capacity_bytes)
            except Exception:
                vmem_cap = 64 * 1024 * 1024               # conservative (v7x per-TC size)
            cp_kwargs["vmem_limit_bytes"] = int(min(vmem_est + (8 << 20),
                                                    int(0.75 * vmem_cap)))

        cost = pl.CostEstimate(
            flops=int(2 * B_i_pad * R_pad * D_pad * C_pad + 2 * B_i_pad * C_pad * B_out),
            transcendentals=0,
            bytes_accessed=int(im_flat.size * itemsize
                               + n_i * (sflat_t.size * itemsize + ind.size * 4)
                               + B_i_pad * B_out * 4),
        )

        kernel = functools.partial(_mrsw_score_kernel, tm=tm, r_pad=R_pad, r=R,
                                   mask_rows=mask_rows)
        scores_p = pl.pallas_call(
            kernel,
            out_shape=jax.ShapeDtypeStruct((B_i_pad, B_out), jnp.float32),
            grid=(n_i, n_c),
            in_specs=[
                pl.BlockSpec((tm * R_pad, D_pad), lambda i, c: (i, 0)),
                pl.BlockSpec((D_pad, tc), lambda i, c: (0, c)),
                pl.BlockSpec((tc, B_out), lambda i, c: (c, 0)),
            ],
            out_specs=pl.BlockSpec((tm, B_out), lambda i, c: (i, 0)),
            compiler_params=pltpu.CompilerParams(**cp_kwargs),
            cost_estimate=cost,
        )(im_flat, sflat_t, ind)

    if not return_loss:
        return scores_p[:B_i, :B_s]

    # --- kernel 2: contrastive loss over the padded score matrix -------------------------
    loss_kernel = functools.partial(_loss_kernel, margin=float(margin),
                                    max_violation=bool(max_violation), n=B_i)
    loss = pl.pallas_call(
        loss_kernel,
        out_shape=jax.ShapeDtypeStruct((1, 1), jnp.float32),
    )(scores_p)[0, 0]

    if return_similarity_mat:
        return loss, scores_p[:B_i, :B_s]
    return loss


# ------------------------------ pure-JAX reference (for checking) ------------------------
def _reference(im_set, s_seq, im_len, s_len, margin, max_violation, aggregation):
    im = im_set / jnp.maximum(jnp.linalg.norm(im_set, axis=2, keepdims=True), 1e-12)
    s = s_seq / jnp.maximum(jnp.linalg.norm(s_seq, axis=2, keepdims=True), 1e-12)
    im = im[:, 1:, :]
    s = s[:, 1:-2, :]
    iml = jnp.asarray([l - 1 for l in im_len])
    sl = jnp.asarray([l - 3 for l in s_len])
    B_i, R, _ = im.shape
    B_s, W, _ = s.shape
    align = jnp.einsum("ird,jwd->ijrw", im, s, precision="highest")
    im_mask = jnp.arange(R)[None, :] >= iml[:, None]
    s_mask = jnp.arange(W)[None, :] >= sl[:, None]
    mask = im_mask[:, None, :, None] | s_mask[None, :, None, :]
    align = jnp.where(mask, 0.0, align)
    if aggregation == "MrSw":
        scores = align.max(axis=2).sum(axis=2)
    elif aggregation == "sum":
        scores = align.sum(axis=(2, 3))
    else:  # mean
        scores = align.mean(axis=(2, 3))
    diag = jnp.diag(scores)
    cost_s = jnp.maximum(margin + scores - diag[:, None], 0.0)
    cost_im = jnp.maximum(margin + scores - diag[None, :], 0.0)
    eye = jnp.eye(scores.shape[0], dtype=bool)
    cost_s = jnp.where(eye, 0.0, cost_s)
    cost_im = jnp.where(eye, 0.0, cost_im)
    if max_violation:
        loss = cost_s.max(axis=1).sum() + cost_im.max(axis=0).sum()
    else:
        loss = cost_s.sum() + cost_im.sum()
    return loss, scores


if __name__ == "__main__":
    key = jax.random.PRNGKey(0)
    k1, k2 = jax.random.split(key)
    B, R0, W0, D = 4, 10, 11, 32            # small shapes consistent with the module
    im_set = jax.random.normal(k1, (B, R0, D), dtype=jnp.float32)
    s_seq = jax.random.normal(k2, (B, W0, D), dtype=jnp.float32)
    im_len = [10, 7, 9, 6]                   # image 0 fully valid -> exercises MrSw pad path
    s_len = [11, 10, 9, 8]
    margin = 0.2

    def _check(name, got, want, rel):
        scale = float(jnp.max(jnp.abs(want))) + 1e-6
        assert jnp.allclose(got, want, atol=rel * scale, rtol=rel), f"{name} mismatch"

    # f32 compute path.
    for aggregation, max_violation in [("MrSw", False), ("MrSw", True),
                                       ("sum", False), ("mean", False)]:
        ref_loss, ref_scores = _reference(im_set, s_seq, im_len, s_len,
                                          margin, max_violation, aggregation)
        loss, scores = alignment_contrastive_loss(
            im_set, s_seq, im_len, s_len, margin=margin, max_violation=max_violation,
            aggregation=aggregation, return_loss=True, return_similarity_mat=True,
            compute_dtype=jnp.float32)
        jax.block_until_ready((loss, scores))
        _check(f"scores (f32, {aggregation}, mv={max_violation})", scores, ref_scores, 0.03)
        _check(f"loss (f32, {aggregation}, mv={max_violation})", loss, ref_loss, 0.03)

    # bf16 compute path (default; MXU-native operands): loose check vs the f32 reference.
    ref_loss, ref_scores = _reference(im_set, s_seq, im_len, s_len, margin, False, "MrSw")
    loss16, scores16 = alignment_contrastive_loss(
        im_set, s_seq, im_len, s_len, margin=margin, max_violation=False,
        aggregation="MrSw", return_loss=True, return_similarity_mat=True)
    jax.block_until_ready((loss16, scores16))
    _check("scores (bf16, MrSw)", scores16, ref_scores, 0.08)
    _check("loss (bf16, MrSw)", loss16, ref_loss, 0.08)

    print("KERNEL_OK")
</pallas_src>

<mosaic_0001>
module attributes {stable_mosaic.version = 11 : i64} {
  func.func @_mrsw_score_kernel(%arg0: i32, %arg1: i32, %arg2: memref<128x128xf32, #tpu.memory_space<vmem>>, %arg3: memref<128x128xf32, #tpu.memory_space<vmem>>, %arg4: memref<128x128xf32, #tpu.memory_space<vmem>>, %arg5: memref<8x128xf32, #tpu.memory_space<vmem>>) attributes {dimension_semantics = [#tpu.dimension_semantics<parallel>, #tpu.dimension_semantics<arbitrary>], iteration_bounds = array<i64: 1, 1>, scalar_prefetch = 0 : i64, scratch_operands = 0 : i64, tpu.core_type = #tpu.core_type<tc>, window_params = [{transform_indices = @transform_0, window_bounds = array<i64: 128, 128>}, {transform_indices = @transform_1, window_bounds = array<i64: 128, 128>}, {transform_indices = @transform_2, window_bounds = array<i64: 128, 128>}, {transform_indices = @transform_3, window_bounds = array<i64: 8, 128>}]} {
    %c0_i32 = arith.constant 0 : i32
    %0 = arith.cmpi eq, %arg1, %c0_i32 : i32
    %1 = arith.extui %0 : i1 to i32
    %c0_i32_0 = arith.constant 0 : i32
    %2 = arith.cmpi ne, %1, %c0_i32_0 : i32
    scf.if %2 {
      %cst_12 = arith.constant 0.000000e+00 : f32
      %13 = vector.broadcast %cst_12 : f32 to vector<8x128xf32>
      %c0_13 = arith.constant 0 : index
      %c0_14 = arith.constant 0 : index
      %14 = vector.load %arg5[%c0_13, %c0_14] : memref<8x128xf32, #tpu.memory_space<vmem>>, vector<8x128xf32>
      tpu.vector_store %arg5[%c0_13, %c0_14], %13 {strides = array<i32>} : memref<8x128xf32, #tpu.memory_space<vmem>>, vector<8x128xf32>,
    } else {
    }
    %c0 = arith.constant 0 : index
    %c0_1 = arith.constant 0 : index
    %3 = vector.load %arg2[%c0, %c0_1] : memref<128x128xf32, #tpu.memory_space<vmem>>, vector<128x128xf32>
    %c0_2 = arith.constant 0 : index
    %c0_3 = arith.constant 0 : index
    %4 = vector.load %arg3[%c0_2, %c0_3] : memref<128x128xf32, #tpu.memory_space<vmem>>, vector<128x128xf32>
    %cst = arith.constant dense<0.000000e+00> : vector<128x128xf32>
    %5 = tpu.matmul %3, %4, %cst {dimension_numbers = #tpu.dot_dimension_numbers<[1], [0], [0], [1], [0, 0, 1, 1], [], []>} : vector<128x128xf32>, vector<128x128xf32>, vector<128x128xf32> -> vector<128x128xf32>
    %6 = vector.shape_cast %5 : vector<128x128xf32> to vector<8x16x128xf32>
    %cst_4 = arith.constant dense<0xFF800000> : vector<8x128xf32>
    %7 = vector.multi_reduction <maximumf>, %6, %cst_4 [1] : vector<8x16x128xf32> to vector<8x128xf32>
    %c0_5 = arith.constant 0 : index
    %c0_6 = arith.constant 0 : index
    %8 = vector.load %arg5[%c0_5, %c0_6] : memref<8x128xf32, #tpu.memory_space<vmem>>, vector<8x128xf32>
    %c0_7 = arith.constant 0 : index
    %c0_8 = arith.constant 0 : index
    %9 = vector.load %arg4[%c0_7, %c0_8] : memref<128x128xf32, #tpu.memory_space<vmem>>, vector<128x128xf32>
    %cst_9 = arith.constant dense<0.000000e+00> : vector<8x128xf32>
    %10 = tpu.matmul %7, %9, %cst_9 {dimension_numbers = #tpu.dot_dimension_numbers<[1], [0], [0], [1], [0, 0, 1, 1], [], []>} : vector<8x128xf32>, vector<128x128xf32>, vector<8x128xf32> -> vector<8x128xf32>
    %11 = arith.addf %8, %10 : vector<8x128xf32>
    %c0_10 = arith.constant 0 : index
    %c0_11 = arith.constant 0 : index
    %12 = vector.load %arg5[%c0_10, %c0_11] : memref<8x128xf32, #tpu.memory_space<vmem>>, vector<8x128xf32>
    tpu.vector_store %arg5[%c0_10, %c0_11], %11 {strides = array<i32>} : memref<8x128xf32, #tpu.memory_space<vmem>>, vector<8x128xf32>,
    return
  }
  func.func @transform_0(%arg0: i32, %arg1: i32) -> (i32, i32) {
    %c0_i32 = arith.constant 0 : i32
    %c0_i32_0 = arith.constant 0 : i32
    return %arg0, %c0_i32 : i32, i32
  }
  func.func @transform_1(%arg0: i32, %arg1: i32) -> (i32, i32) {
    %c0_i32 = arith.constant 0 : i32
    %c0_i32_0 = arith.constant 0 : i32
    return %c0_i32, %arg1 : i32, i32
  }
  func.func @transform_2(%arg0: i32, %arg1: i32) -> (i32, i32) {
    %c0_i32 = arith.constant 0 : i32
    %c0_i32_0 = arith.constant 0 : i32
    return %arg1, %c0_i32 : i32, i32
  }
  func.func @transform_3(%arg0: i32, %arg1: i32) -> (i32, i32) {
    %c0_i32 = arith.constant 0 : i32
    %c0_i32_0 = arith.constant 0 : i32
    return %arg0, %c0_i32 : i32, i32
  }
}

</mosaic_0001>

<llo_original>
// kernel: tpu_custom_call.1
$region0: #{tpu_custom_call.1}
  #allocation0 [shape = 'u32[]', space=smem, size = 0x4, offset = 0x4, fixed_abs, tag = 'smem constant byte address 0x4 - core index']
  #allocation1 [shape = 'u32[72,128]{1,0:T(1,128)}', space=vmem, size = 0x9000, scoped, tag = 'internal scratch']
  %s0 = inlined_call_operand.hbm [shape: f32[128,128], index: 0, kind: input, shape index: {}]
  %s1 = inlined_call_operand.hbm [shape: f32[128,128], index: 1, kind: input, shape index: {}]
  %s2 = inlined_call_operand.hbm [shape: f32[128,128], index: 2, kind: input, shape index: {}]
  %s3 = inlined_call_operand.hbm [shape: f32[8,128], index: 3, kind: output, shape index: {}]
  %s4 = sld [smem:[#allocation0]]
  $region38: #{tpu_custom_call.1} parent=0
    _
  %s6 = ssub.s32 1, %s4
  %s7 = scalar_select 0, %s6, %s4
  $region1: #{tpu_custom_call.1} parent=0
    #allocation2 [shape = 'u8[65536]{0}', space=vmem, size = 0x10000, scoped, tag = 'input window, operand 0, single buffered']
    #allocation3 [shape = 's32[1]{0}', space=sflag, size = 0x4, scoped, tag = 'scoped memory for tpu_custom_call.1']
    #allocation4 [shape = 's32[1]{0}', space=sflag, size = 0x4, scoped, tag = 'scoped memory for tpu_custom_call.1']
    #allocation5 [shape = 'u8[65536]{0}', space=vmem, size = 0x10000, scoped, tag = 'input window, operand 1, single buffered']
    #allocation6 [shape = 's32[1]{0}', space=sflag, size = 0x4, scoped, tag = 'scoped memory for tpu_custom_call.1']
    #allocation7 [shape = 'u8[65536]{0}', space=vmem, size = 0x10000, scoped, tag = 'input window, operand 2, single buffered']
    #allocation8 [shape = 'u8[4096]{0}', space=vmem, size = 0x1000, scoped, tag = 'output window, operand 0, single buffered']
    %8 = vsyncpa [#allocation3], 0
    %9 = vsyncpa [#allocation6], 0
    %10 = vsyncpa [#allocation4], 0
    // Predicated region
    $region2: #{tpu_custom_call.1} parent=1 // pred_check
      _
    $region3: #{tpu_custom_call.1} parent=1 // pred_check_branch
      %12 = sbr.rel (0) target = $region5
    $region4: #{tpu_custom_call.1} parent=1 // pred_region
      %14 = vsyncadd [#allocation3], 0
      %s15 = sshll.u32 %s0, 4
      %s16 = int_to_ptr.hbm [resolvable:$true] %s15
      %s17 = sshll.u32 [#allocation2], 4
      %s18 = int_to_ptr.vmem [resolvable:$true] %s17
      %23 = dma.hbm_to_vmem [thread:$0]  %s16, 2048, %s18, [#allocation3], 128, 128, 8
    $region5: #{tpu_custom_call.1} parent=1 // pred_fallthru
      _
    // Predicated region
    $region6: #{tpu_custom_call.1} parent=1 // pred_check
      _
    $region7: #{tpu_custom_call.1} parent=1 // pred_check_branch
      %25 = sbr.rel (0) target = $region9
    $region8: #{tpu_custom_call.1} parent=1 // pred_region
      %27 = vsyncadd [#allocation6], 0
      %s28 = sshll.u32 %s1, 4
      %s29 = int_to_ptr.hbm [resolvable:$true] %s28
      %s30 = sshll.u32 [#allocation5], 4
      %s31 = int_to_ptr.vmem [resolvable:$true] %s30
      %36 = dma.hbm_to_vmem [thread:$0]  %s29, 2048, %s31, [#allocation6], 128, 128, 8
    $region9: #{tpu_custom_call.1} parent=1 // pred_fallthru
      _
    // Predicated region
    $region10: #{tpu_custom_call.1} parent=1 // pred_check
      _
    $region11: #{tpu_custom_call.1} parent=1 // pred_check_branch
      %38 = sbr.rel (0) target = $region13
    $region12: #{tpu_custom_call.1} parent=1 // pred_region
      %40 = vsyncadd [#allocation6], 0
      %s41 = sshll.u32 %s2, 4
      %s42 = int_to_ptr.hbm [resolvable:$true] %s41
      %s43 = sshll.u32 [#allocation7], 4
      %s44 = int_to_ptr.vmem [resolvable:$true] %s43
      %49 = dma.hbm_to_vmem [thread:$0]  %s42, 2048, %s44, [#allocation6], 128, 128, 8
    $region13: #{tpu_custom_call.1} parent=1 // pred_fallthru
      _
    // Predicated region
    $region14: #{tpu_custom_call.1} parent=1 // pred_check
      _
    $region15: #{tpu_custom_call.1} parent=1 // pred_check_branch
      %51 = sbr.rel (0) target = $region17
    $region16: #{tpu_custom_call.1} parent=1 // pred_region
      %53 = dma.done [#allocation3], 2048
    $region17: #{tpu_custom_call.1} parent=1 // pred_fallthru
      _
    // Predicated region
    $region18: #{tpu_custom_call.1} parent=1 // pred_check
      _
    $region19: #{tpu_custom_call.1} parent=1 // pred_check_branch
      %55 = sbr.rel (0) target = $region21
    $region20: #{tpu_custom_call.1} parent=1 // pred_region
      %57 = dma.done [#allocation6], 2048
    $region21: #{tpu_custom_call.1} parent=1 // pred_fallthru
      _
    // Predicated region
    $region22: #{tpu_custom_call.1} parent=1 // pred_check
      _
    $region23: #{tpu_custom_call.1} parent=1 // pred_check_branch
      %59 = sbr.rel (0) target = $region25
    $region24: #{tpu_custom_call.1} parent=1 // pred_region
      %61 = dma.done [#allocation6], 2048
    $region25: #{tpu_custom_call.1} parent=1 // pred_fallthru
      _
    %p62 = scmp.eq.s32.totalorder 0, 0
    // Predicated region
    $region26: #{tpu_custom_call.1} parent=1 // pred_check
      %p63 = pneg %p62
    $region27: #{tpu_custom_call.1} parent=1 // pred_check_branch
      %65 = sbr.rel (%p63) target = $region29
    $region28: #{tpu_custom_call.1} parent=1 // pred_region
      %66 = vst [vmem:[#allocation8] sm:$0xff] 0.0
    $region29: #{tpu_custom_call.1} parent=1 // pred_fallthru
      _
    %v67 = vld [vmem:[#allocation2] sm:$0xff]
    %v68 = vld [vmem:[#allocation2 + $0x8] sm:$0xff]
    %v69 = vld [vmem:[#allocation2 + $0x10] sm:$0xff]
    %v70 = vld [vmem:[#allocation2 + $0x18] sm:$0xff]
    %v71 = vld [vmem:[#allocation2 + $0x20] sm:$0xff]
    %v72 = vld [vmem:[#allocation2 + $0x28] sm:$0xff]
    %v73 = vld [vmem:[#allocation2 + $0x30] sm:$0xff]
    %v74 = vld [vmem:[#allocation2 + $0x38] sm:$0xff]
    %v75 = vld [vmem:[#allocation2 + $0x40] sm:$0xff]
    %v76 = vld [vmem:[#allocation2 + $0x48] sm:$0xff]
    %v77 = vld [vmem:[#allocation2 + $0x50] sm:$0xff]
    %v78 = vld [vmem:[#allocation2 + $0x58] sm:$0xff]
    %v79 = vld [vmem:[#allocation2 + $0x60] sm:$0xff]
    %v80 = vld [vmem:[#allocation2 + $0x68] sm:$0xff]
    %v81 = vld [vmem:[#allocation2 + $0x70] sm:$0xff]
    %v82 = vld [vmem:[#allocation2 + $0x78] sm:$0xff]
    %v83 = vld [vmem:[#allocation5] sm:$0xff]
    %v84 = vld [vmem:[#allocation5 + $0x8] sm:$0xff]
    %v85 = vld [vmem:[#allocation5 + $0x10] sm:$0xff]
    %v86 = vld [vmem:[#allocation5 + $0x18] sm:$0xff]
    %v87 = vld [vmem:[#allocation5 + $0x20] sm:$0xff]
    %v88 = vld [vmem:[#allocation5 + $0x28] sm:$0xff]
    %v89 = vld [vmem:[#allocation5 + $0x30] sm:$0xff]
    %v90 = vld [vmem:[#allocation5 + $0x38] sm:$0xff]
    %v91 = vld [vmem:[#allocation5 + $0x40] sm:$0xff]
    %v92 = vld [vmem:[#allocation5 + $0x48] sm:$0xff]
    %v93 = vld [vmem:[#allocation5 + $0x50] sm:$0xff]
    %v94 = vld [vmem:[#allocation5 + $0x58] sm:$0xff]
    %v95 = vld [vmem:[#allocation5 + $0x60] sm:$0xff]
    %v96 = vld [vmem:[#allocation5 + $0x68] sm:$0xff]
    %v97 = vld [vmem:[#allocation5 + $0x70] sm:$0xff]
    %v98 = vld [vmem:[#allocation5 + $0x78] sm:$0xff]
    %99 = vmatpush.msra.mxu0 %v98
    %100 = vmatpush.msra.mxu0 %v97
    %101 = vmatpush.msra.mxu0 %v96
    %102 = vmatpush.msra.mxu0 %v95
    %103 = vmatpush.msra.mxu0 %v94
    %104 = vmatpush.msra.mxu0 %v93
    %105 = vmatpush.msra.mxu0 %v92
    %106 = vmatpush.msra.mxu0 %v91
    %107 = vmatpush.msra.mxu0 %v90
    %108 = vmatpush.msra.mxu0 %v89
    %109 = vmatpush.msra.mxu0 %v88
    %110 = vmatpush.msra.mxu0 %v87
    %111 = vmatpush.msra.mxu0 %v86
    %112 = vmatpush.msra.mxu0 %v85
    %113 = vmatpush.msra.mxu0 %v84
    %114 = vmatpush.msra.mxu0 %v83
    %115 = vmatmul.f32.gmra.mxu0 %v67
    %v116 = vpop.f32.mrf.mxu0
    %v117 = vadd.f32 0.0, %v116
    %118 = vmatmul.f32.gmra.mxu0 %v68
    %v119 = vpop.f32.mrf.mxu0
    %v120 = vadd.f32 0.0, %v119
    %121 = vmatmul.f32.gmra.mxu0 %v69
    %v122 = vpop.f32.mrf.mxu0
    %v123 = vadd.f32 0.0, %v122
    %124 = vmatmul.f32.gmra.mxu0 %v70
    %v125 = vpop.f32.mrf.mxu0
    %v126 = vadd.f32 0.0, %v125
    %127 = vmatmul.f32.gmra.mxu0 %v71
    %v128 = vpop.f32.mrf.mxu0
    %v129 = vadd.f32 0.0, %v128
    %130 = vmatmul.f32.gmra.mxu0 %v72
    %v131 = vpop.f32.mrf.mxu0
    %v132 = vadd.f32 0.0, %v131
    %133 = vmatmul.f32.gmra.mxu0 %v73
    %v134 = vpop.f32.mrf.mxu0
    %v135 = vadd.f32 0.0, %v134
    %136 = vmatmul.f32.gmra.mxu0 %v74
    %v137 = vpop.f32.mrf.mxu0
    %v138 = vadd.f32 0.0, %v137
    %139 = vmatmul.f32.gmra.mxu0 %v75
    %v140 = vpop.f32.mrf.mxu0
    %v141 = vadd.f32 0.0, %v140
    %142 = vmatmul.f32.gmra.mxu0 %v76
    %v143 = vpop.f32.mrf.mxu0
    %v144 = vadd.f32 0.0, %v143
    %145 = vmatmul.f32.gmra.mxu0 %v77
    %v146 = vpop.f32.mrf.mxu0
    %v147 = vadd.f32 0.0, %v146
    %148 = vmatmul.f32.gmra.mxu0 %v78
    %v149 = vpop.f32.mrf.mxu0
    %v150 = vadd.f32 0.0, %v149
    %151 = vmatmul.f32.gmra.mxu0 %v79
    %v152 = vpop.f32.mrf.mxu0
    %v153 = vadd.f32 0.0, %v152
    %154 = vmatmul.f32.gmra.mxu0 %v80
    %v155 = vpop.f32.mrf.mxu0
    %v156 = vadd.f32 0.0, %v155
    %157 = vmatmul.f32.gmra.mxu0 %v81
    %v158 = vpop.f32.mrf.mxu0
    %v159 = vadd.f32 0.0, %v158
    %160 = vmatmul.f32.gmra.mxu0 %v82
    %v161 = vpop.f32.mrf.mxu0
    %v162 = vadd.f32 0.0, %v161
    %163 = vdwg.mxu0
    %v164 = vmax.f32 %v117, %v120
    %v165 = vrot.slane %v164, 4
    %v166 = vmax.f32 %v164, %v165
    %v167 = vrot.slane %v166, 2
    %v168 = vmax.f32 %v166, %v167
    %v169 = vrot.slane %v168, 1
    %v170 = vmax.f32 %v168, %v169
    %v171 = vmax.f32 %v123, %v126
    %v172 = vrot.slane %v171, 4
    %v173 = vmax.f32 %v171, %v172
    %v174 = vrot.slane %v173, 2
    %v175 = vmax.f32 %v173, %v174
    %v176 = vrot.slane %v175, 1
    %v177 = vmax.f32 %v175, %v176
    %v178 = vmax.f32 %v129, %v132
    %v179 = vrot.slane %v178, 4
    %v180 = vmax.f32 %v178, %v179
    %v181 = vrot.slane %v180, 2
    %v182 = vmax.f32 %v180, %v181
    %v183 = vrot.slane %v182, 1
    %v184 = vmax.f32 %v182, %v183
    %v185 = vmax.f32 %v135, %v138
    %v186 = vrot.slane %v185, 4
    %v187 = vmax.f32 %v185, %v186
    %v188 = vrot.slane %v187, 2
    %v189 = vmax.f32 %v187, %v188
    %v190 = vrot.slane %v189, 1
    %v191 = vmax.f32 %v189, %v190
    %v192 = vmax.f32 %v141, %v144
    %v193 = vrot.slane %v192, 4
    %v194 = vmax.f32 %v192, %v193
    %v195 = vrot.slane %v194, 2
    %v196 = vmax.f32 %v194, %v195
    %v197 = vrot.slane %v196, 1
    %v198 = vmax.f32 %v196, %v197
    %v199 = vmax.f32 %v147, %v150
    %v200 = vrot.slane %v199, 4
    %v201 = vmax.f32 %v199, %v200
    %v202 = vrot.slane %v201, 2
    %v203 = vmax.f32 %v201, %v202
    %v204 = vrot.slane %v203, 1
    %v205 = vmax.f32 %v203, %v204
    %v206 = vmax.f32 %v153, %v156
    %v207 = vrot.slane %v206, 4
    %v208 = vmax.f32 %v206, %v207
    %v209 = vrot.slane %v208, 2
    %v210 = vmax.f32 %v208, %v209
    %v211 = vrot.slane %v210, 1
    %v212 = vmax.f32 %v210, %v211
    %v213 = vmax.f32 %v159, %v162
    %v214 = vrot.slane %v213, 4
    %v215 = vmax.f32 %v213, %v214
    %v216 = vrot.slane %v215, 2
    %v217 = vmax.f32 %v215, %v216
    %v218 = vrot.slane %v217, 1
    %v219 = vmax.f32 %v217, %v218
    %v220 = vld [vmem:[#allocation8] sm:$0xff]
    %v221 = vld [vmem:[#allocation7] sm:$0xff]
    %v222 = vld [vmem:[#allocation7 + $0x8] sm:$0xff]
    %v223 = vld [vmem:[#allocation7 + $0x10] sm:$0xff]
    %v224 = vld [vmem:[#allocation7 + $0x18] sm:$0xff]
    %v225 = vld [vmem:[#allocation7 + $0x20] sm:$0xff]
    %v226 = vld [vmem:[#allocation7 + $0x28] sm:$0xff]
    %v227 = vld [vmem:[#allocation7 + $0x30] sm:$0xff]
    %v228 = vld [vmem:[#allocation7 + $0x38] sm:$0xff]
    %v229 = vld [vmem:[#allocation7 + $0x40] sm:$0xff]
    %v230 = vld [vmem:[#allocation7 + $0x48] sm:$0xff]
    %v231 = vld [vmem:[#allocation7 + $0x50] sm:$0xff]
    %v232 = vld [vmem:[#allocation7 + $0x58] sm:$0xff]
    %v233 = vld [vmem:[#allocation7 + $0x60] sm:$0xff]
    %v234 = vld [vmem:[#allocation7 + $0x68] sm:$0xff]
    %v235 = vld [vmem:[#allocation7 + $0x70] sm:$0xff]
    %v236 = vld [vmem:[#allocation7 + $0x78] sm:$0xff]
    %vm245 = vcmask 1041409
    %v246 = vsel %vm245, %v177, %v170
    %vm247 = vcmask 1042434
    %v248 = vsel %vm247, %v184, %v246
    %vm249 = vcmask 1043459
    %v250 = vsel %vm249, %v191, %v248
    %vm251 = vcmask 1044484
    %v252 = vsel %vm251, %v198, %v250
    %vm253 = vcmask 1045509
    %v254 = vsel %vm253, %v205, %v252
    %vm255 = vcmask 1046534
    %v256 = vsel %vm255, %v212, %v254
    %vm257 = vcmask 1047559
    %v258 = vsel %vm257, %v219, %v256
    %260 = vmatpush.msra.mxu0 %v236
    %261 = vmatpush.msra.mxu0 %v235
    %262 = vmatpush.msra.mxu0 %v234
    %263 = vmatpush.msra.mxu0 %v233
    %264 = vmatpush.msra.mxu0 %v232
    %265 = vmatpush.msra.mxu0 %v231
    %266 = vmatpush.msra.mxu0 %v230
    %267 = vmatpush.msra.mxu0 %v229
    %268 = vmatpush.msra.mxu0 %v228
    %269 = vmatpush.msra.mxu0 %v227
    %270 = vmatpush.msra.mxu0 %v226
    %271 = vmatpush.msra.mxu0 %v225
    %272 = vmatpush.msra.mxu0 %v224
    %273 = vmatpush.msra.mxu0 %v223
    %274 = vmatpush.msra.mxu0 %v222
    %275 = vmatpush.msra.mxu0 %v221
    %276 = vmatmul.f32.gmra.mxu0 %v258
    %v277 = vpop.f32.mrf.mxu0
    %v278 = vadd.f32 0.0, %v277
    %279 = vdwg.mxu0
    %v280 = vadd.f32 %v220, %v278
    %281 = vst [vmem:[#allocation8] sm:$0xff] %v280
    // Predicated region
    $region30: #{tpu_custom_call.1} parent=1 // pred_check
      _
    $region31: #{tpu_custom_call.1} parent=1 // pred_check_branch
      %283 = sbr.rel (0) target = $region33
    $region32: #{tpu_custom_call.1} parent=1 // pred_region
      %285 = vsyncadd [#allocation4], 0
      %s287 = sshll.u32 [#allocation8], 4
      %s288 = int_to_ptr.vmem [resolvable:$true] %s287
      %s289 = sshll.u32 %s3, 4
      %s290 = int_to_ptr.hbm [resolvable:$true] %s289
      %292 = dma.vmem_to_hbm [thread:$0]  %s288, 128, %s290, [#allocation4]
    $region33: #{tpu_custom_call.1} parent=1 // pred_fallthru
      _
    // Predicated region
    $region34: #{tpu_custom_call.1} parent=1 // pred_check
      _
    $region35: #{tpu_custom_call.1} parent=1 // pred_check_branch
      %294 = sbr.rel (0) target = $region37
    $region36: #{tpu_custom_call.1} parent=1 // pred_region
      %296 = dma.done [#allocation4], 128
    $region37: #{tpu_custom_call.1} parent=1 // pred_fallthru
      _
    %297 = vsyncpa [#allocation3], 1
    %298 = vsyncpa [#allocation6], 1
    %299 = vsyncpa [#allocation4], 1

</llo_original>
